<compile_context>
chip_gen: v5e
topology: v5e:2x2
jax: 0.10.0
libtpu: 0.0.40
codegen_flags: <defaults>
</compile_context>

<pallas_src>
import functools

import jax
import jax.numpy as jnp
from jax.experimental import pallas as pl
from jax.experimental.pallas import tpu as pltpu


# --------------------------------------------------------------------------- kernels
def _rgcn_onehot_kernel(a_ref, msg_ref, root_ref, bias_ref, out_ref, *, negative_slope):
    """Layer-1 fast path (x == one-hot node ids). Messages are W1_r rows directly."""
    r = pl.program_id(1)
    k = pl.program_id(2)

    @pl.when((r == 0) & (k == 0))
    def _init():
        # x @ root1 == root1 rows for one-hot features; fold bias in here too.
        out_ref[...] = root_ref[...] + bias_ref[...]

    # MXU: (TM, TK) bf16 @ (TK, Cout) bf16 -> f32, accumulated in the f32 output block.
    out_ref[...] += jnp.dot(a_ref[...], msg_ref[...].astype(jnp.bfloat16),
                            preferred_element_type=jnp.float32)

    if negative_slope is not None:
        @pl.when((r == pl.num_programs(1) - 1) & (k == pl.num_programs(2) - 1))
        def _finalize():
            res = out_ref[...]
            out_ref[...] = jnp.where(res >= 0, res, negative_slope * res)


def _rgcn_dense_kernel(a_ref, xk_ref, w_ref, xm_ref, root_ref, bias_ref, out_ref,
                       *, negative_slope):
    """Dense-feature layer: out = sum_r A_r @ (x @ W_r) + x @ root + bias."""
    r = pl.program_id(1)
    k = pl.program_id(2)

    @pl.when((r == 0) & (k == 0))
    def _init():
        out_ref[...] = (jnp.dot(xm_ref[...], root_ref[...],
                                preferred_element_type=jnp.float32)
                        + bias_ref[...])

    # Reassociated product: xw = x_tile @ W_r is (TK, Cout) -- tiny vs. the A matmul.
    xw = jnp.dot(xk_ref[...], w_ref[...], preferred_element_type=jnp.float32)
    out_ref[...] += jnp.dot(a_ref[...], xw.astype(jnp.bfloat16),
                            preferred_element_type=jnp.float32)

    if negative_slope is not None:
        @pl.when((r == pl.num_programs(1) - 1) & (k == pl.num_programs(2) - 1))
        def _finalize():
            res = out_ref[...]
            out_ref[...] = jnp.where(res >= 0, res, negative_slope * res)


# --------------------------------------------------------------------------- wrapper
def _pick_tile(n):
    """Largest generation-friendly tile that divides n (falls back to full extent)."""
    for t in (1024, 512, 256, 128):
        if n % t == 0:
            return t
    return n


def rgcn_layer(A, x, W, root, bias, *, negative_slope=None, tm=None, tk=None,
               vmem_limit_bytes=48 * 1024 * 1024):
    """One FastRGCNConv layer.

    A:    (R, N, N) bfloat16, per-relation mean-normalized dense adjacency.
    x:    None (layer-1 one-hot fast path) or (N, Cin) float32.
    W:    (R, N, Cout) if x is None else (R, Cin, Cout).
    root: (N, Cout)    if x is None else (Cin, Cout).
    bias: (Cout,)
    """
    R, N, _ = A.shape
    Cout = W.shape[-1]
    tm = tm or _pick_tile(N)
    tk = tk or _pick_tile(N)
    grid = (N // tm, R, N // tk)
    bias2d = bias.reshape(1, Cout)

    a_spec = pl.BlockSpec((pl.Squeezed(), tm, tk), lambda m, r, k: (r, m, k))
    out_spec = pl.BlockSpec((tm, Cout), lambda m, r, k: (m, 0))   # resident across (r, k)
    bias_spec = pl.BlockSpec((1, Cout), lambda m, r, k: (0, 0))

    if x is None:
        kernel = functools.partial(_rgcn_onehot_kernel, negative_slope=negative_slope)
        in_specs = [
            a_spec,
            pl.BlockSpec((pl.Squeezed(), tk, Cout), lambda m, r, k: (r, k, 0)),   # W1_r rows
            pl.BlockSpec((tm, Cout), lambda m, r, k: (m, 0)),                     # root1 rows
            bias_spec,
        ]
        args = (A, W, root, bias2d)
    else:
        Cin = x.shape[-1]
        kernel = functools.partial(_rgcn_dense_kernel, negative_slope=negative_slope)
        in_specs = [
            a_spec,
            pl.BlockSpec((tk, Cin), lambda m, r, k: (k, 0)),                      # x src tile
            pl.BlockSpec((pl.Squeezed(), Cin, Cout), lambda m, r, k: (r, 0, 0)),  # W_r
            pl.BlockSpec((tm, Cin), lambda m, r, k: (m, 0)),                      # x dst tile
            pl.BlockSpec((Cin, Cout), lambda m, r, k: (0, 0)),                    # root
            bias_spec,
        ]
        args = (A, x, W, x, root, bias2d)

    return pl.pallas_call(
        kernel,
        out_shape=jax.ShapeDtypeStruct((N, Cout), jnp.float32),
        grid_spec=pltpu.PrefetchScalarGridSpec(
            num_scalar_prefetch=0,
            grid=grid,
            in_specs=in_specs,
            out_specs=out_spec,
        ),
        compiler_params=pltpu.CompilerParams(
            dimension_semantics=("parallel", "arbitrary", "arbitrary"),
            vmem_limit_bytes=vmem_limit_bytes,
        ),
    )(*args)


# --------------------------------------------------------------------------- glue
def build_norm_adj(edge_index, edge_type, num_nodes, num_rels, dtype=jnp.bfloat16):
    """Dense per-relation adjacency with FastRGCNConv 'mean' normalization (plain JAX glue)."""
    src, dst = edge_index[0], edge_index[1]
    A = jnp.zeros((num_rels, num_nodes, num_nodes), jnp.float32)
    A = A.at[edge_type, dst, src].add(1.0)                      # A[r, i, j] = #edges j->i, rel r
    deg = A.sum(axis=-1, keepdims=True)
    return (A / jnp.clip(deg, 1.0, None)).astype(dtype)


def _pad_to(a, axis, mult):
    pad = (-a.shape[axis]) % mult
    if pad == 0:
        return a
    cfg = [(0, 0)] * a.ndim
    cfg[axis] = (0, pad)
    return jnp.pad(a, cfg)


def fast_rgcn_forward(edge_index, edge_type, params, num_nodes, num_rels, *, lane_pad=128):
    nhid = params["bias1"].shape[0]
    A = build_norm_adj(edge_index, edge_type, num_nodes, num_rels)        # (R, N, N) bf16

    # Zero-pad the hidden dim to a lane-dense multiple of 128; padded columns stay
    # exactly zero through both layers (leaky_relu(0) == 0, zero rows/cols in W2/root2).
    W1 = _pad_to(params["W1"], -1, lane_pad).astype(jnp.bfloat16)         # (R, N, Cp)
    root1 = _pad_to(params["root1"], -1, lane_pad)                        # (N, Cp)
    bias1 = _pad_to(params["bias1"], -1, lane_pad)                        # (Cp,)
    W2 = _pad_to(_pad_to(params["W2"], 1, lane_pad), -1, lane_pad)        # (R, Cp, Cp)
    root2 = _pad_to(_pad_to(params["root2"], 0, lane_pad), -1, lane_pad)  # (Cp, Cp)
    bias2 = _pad_to(params["bias2"], -1, lane_pad)                        # (Cp,)

    # layer 1: x is None -> identity-feature fast path (leaky_relu fused in kernel)
    h = rgcn_layer(A, None, W1, root1, bias1, negative_slope=0.01)
    # layer 2: dense features
    out = rgcn_layer(A, h, W2, root2, bias2, negative_slope=None)
    return out[:, :nhid]


# --------------------------------------------------------------------------- reference
def _reference(edge_index, edge_type, params, num_nodes, num_rels):
    src, dst = edge_index[0], edge_index[1]
    A = jnp.zeros((num_rels, num_nodes, num_nodes), jnp.float32)
    A = A.at[edge_type, dst, src].add(1.0)
    A = A / jnp.clip(A.sum(axis=-1, keepdims=True), 1.0, None)
    h = jnp.einsum("rij,rjl->il", A, params["W1"]) + params["root1"] + params["bias1"]
    h = jnp.where(h >= 0, h, 0.01 * h)
    out = (jnp.einsum("rij,jk,rkl->il", A, h, params["W2"])
           + h @ params["root2"] + params["bias2"])
    return out


if __name__ == "__main__":
    num_nodes, nhid, num_rels = 16, 32, 4
    num_edges = 64

    key = jax.random.PRNGKey(0)
    k_src, k_dst, k_rel, k1, k2, k3, k4, k5, k6 = jax.random.split(key, 9)

    edge_index = jnp.stack([
        jax.random.randint(k_src, (num_edges,), 0, num_nodes),
        jax.random.randint(k_dst, (num_edges,), 0, num_nodes),
    ]).astype(jnp.int32)
    edge_type = jax.random.randint(k_rel, (num_edges,), 0, num_rels).astype(jnp.int32)

    scale = 0.1
    params = {
        "W1":    scale * jax.random.normal(k1, (num_rels, num_nodes, nhid), jnp.float32),
        "root1": scale * jax.random.normal(k2, (num_nodes, nhid), jnp.float32),
        "bias1": scale * jax.random.normal(k3, (nhid,), jnp.float32),
        "W2":    scale * jax.random.normal(k4, (num_rels, nhid, nhid), jnp.float32),
        "root2": scale * jax.random.normal(k5, (nhid, nhid), jnp.float32),
        "bias2": scale * jax.random.normal(k6, (nhid,), jnp.float32),
    }

    out = fast_rgcn_forward(edge_index, edge_type, params, num_nodes, num_rels)
    out = jax.block_until_ready(out)

    ref = _reference(edge_index, edge_type, params, num_nodes, num_rels)
    assert out.shape == (num_nodes, nhid)
    # bf16 adjacency / message operands (f32 accumulation) -> loosened tolerance.
    assert jnp.allclose(out, ref, atol=2e-2, rtol=2e-2), float(jnp.max(jnp.abs(out - ref)))

    print("KERNEL_OK")
</pallas_src>

<mosaic_0001>
module attributes {stable_mosaic.version = 11 : i64} {
  func.func @_rgcn_onehot_kernel(%arg0: i32, %arg1: i32, %arg2: i32, %arg3: memref<1x16x16xbf16, #tpu.memory_space<vmem>>, %arg4: memref<1x16x128xbf16, #tpu.memory_space<vmem>>, %arg5: memref<16x128xf32, #tpu.memory_space<vmem>>, %arg6: memref<1x128xf32, #tpu.memory_space<vmem>>, %arg7: memref<16x128xf32, #tpu.memory_space<vmem>>) attributes {dimension_semantics = [#tpu.dimension_semantics<parallel>, #tpu.dimension_semantics<arbitrary>, #tpu.dimension_semantics<arbitrary>], iteration_bounds = array<i64: 1, 4, 1>, scalar_prefetch = 0 : i64, scratch_operands = 0 : i64, tpu.core_type = #tpu.core_type<tc>, window_params = [{transform_indices = @transform_0, window_bounds = array<i64: 1, 16, 16>}, {transform_indices = @transform_1, window_bounds = array<i64: 1, 16, 128>}, {transform_indices = @transform_2, window_bounds = array<i64: 16, 128>}, {pipeline_mode = #tpu.pipeline_mode<synchronous>, transform_indices = @transform_3, window_bounds = array<i64: 1, 128>}, {transform_indices = @transform_4, window_bounds = array<i64: 16, 128>}]} {
    %c0_i32 = arith.constant 0 : i32
    %0 = arith.cmpi eq, %arg1, %c0_i32 : i32
    %c0_i32_0 = arith.constant 0 : i32
    %1 = arith.cmpi eq, %arg2, %c0_i32_0 : i32
    %2 = arith.andi %0, %1 : i1
    %3 = arith.extui %2 : i1 to i32
    %c0_i32_1 = arith.constant 0 : i32
    %4 = arith.cmpi ne, %3, %c0_i32_1 : i32
    scf.if %4 {
      %c0_13 = arith.constant 0 : index
      %c0_14 = arith.constant 0 : index
      %18 = vector.load %arg5[%c0_13, %c0_14] : memref<16x128xf32, #tpu.memory_space<vmem>>, vector<16x128xf32>
      %c0_15 = arith.constant 0 : index
      %c0_16 = arith.constant 0 : index
      %19 = vector.load %arg6[%c0_15, %c0_16] : memref<1x128xf32, #tpu.memory_space<vmem>>, vector<1x128xf32>
      %20 = vector.broadcast %19 : vector<1x128xf32> to vector<16x128xf32>
      %21 = arith.addf %18, %20 : vector<16x128xf32>
      %c0_17 = arith.constant 0 : index
      %c0_18 = arith.constant 0 : index
      %22 = vector.load %arg7[%c0_17, %c0_18] : memref<16x128xf32, #tpu.memory_space<vmem>>, vector<16x128xf32>
      tpu.vector_store %arg7[%c0_17, %c0_18], %21 {strides = array<i32>} : memref<16x128xf32, #tpu.memory_space<vmem>>, vector<16x128xf32>,
    } else {
    }
    %c0 = arith.constant 0 : index
    %c0_2 = arith.constant 0 : index
    %5 = vector.load %arg7[%c0, %c0_2] : memref<16x128xf32, #tpu.memory_space<vmem>>, vector<16x128xf32>
    %c0_3 = arith.constant 0 : index
    %c0_4 = arith.constant 0 : index
    %c0_5 = arith.constant 0 : index
    %6 = vector.load %arg3[%c0_3, %c0_4, %c0_5] : memref<1x16x16xbf16, #tpu.memory_space<vmem>>, vector<1x16x16xbf16>
    %7 = vector.shape_cast %6 : vector<1x16x16xbf16> to vector<16x16xbf16>
    %c0_6 = arith.constant 0 : index
    %c0_7 = arith.constant 0 : index
    %c0_8 = arith.constant 0 : index
    %8 = vector.load %arg4[%c0_6, %c0_7, %c0_8] : memref<1x16x128xbf16, #tpu.memory_space<vmem>>, vector<1x16x128xbf16>
    %9 = vector.shape_cast %8 : vector<1x16x128xbf16> to vector<16x128xbf16>
    %cst = arith.constant dense<0.000000e+00> : vector<16x128xf32>
    %10 = tpu.matmul %7, %9, %cst {dimension_numbers = #tpu.dot_dimension_numbers<[1], [0], [0], [1], [0, 0, 1, 1], [], []>} : vector<16x16xbf16>, vector<16x128xbf16>, vector<16x128xf32> -> vector<16x128xf32>
    %11 = arith.addf %5, %10 : vector<16x128xf32>
    %c0_9 = arith.constant 0 : index
    %c0_10 = arith.constant 0 : index
    %12 = vector.load %arg7[%c0_9, %c0_10] : memref<16x128xf32, #tpu.memory_space<vmem>>, vector<16x128xf32>
    tpu.vector_store %arg7[%c0_9, %c0_10], %11 {strides = array<i32>} : memref<16x128xf32, #tpu.memory_space<vmem>>, vector<16x128xf32>,
    %c3_i32 = arith.constant 3 : i32
    %13 = arith.cmpi eq, %arg1, %c3_i32 : i32
    %c0_i32_11 = arith.constant 0 : i32
    %14 = arith.cmpi eq, %arg2, %c0_i32_11 : i32
    %15 = arith.andi %13, %14 : i1
    %16 = arith.extui %15 : i1 to i32
    %c0_i32_12 = arith.constant 0 : i32
    %17 = arith.cmpi ne, %16, %c0_i32_12 : i32
    scf.if %17 {
      %c0_13 = arith.constant 0 : index
      %c0_14 = arith.constant 0 : index
      %18 = vector.load %arg7[%c0_13, %c0_14] : memref<16x128xf32, #tpu.memory_space<vmem>>, vector<16x128xf32>
      %cst_15 = arith.constant 0.000000e+00 : f32
      %19 = vector.broadcast %cst_15 : f32 to vector<16x128xf32>
      %20 = arith.cmpf oge, %18, %19 : vector<16x128xf32>
      %cst_16 = arith.constant 0.00999999977 : f32
      %21 = vector.broadcast %cst_16 : f32 to vector<16x128xf32>
      %22 = arith.mulf %21, %18 : vector<16x128xf32>
      %23 = arith.select %20, %18, %22 : vector<16x128xi1>, vector<16x128xf32>
      %c0_17 = arith.constant 0 : index
      %c0_18 = arith.constant 0 : index
      %24 = vector.load %arg7[%c0_17, %c0_18] : memref<16x128xf32, #tpu.memory_space<vmem>>, vector<16x128xf32>
      tpu.vector_store %arg7[%c0_17, %c0_18], %23 {strides = array<i32>} : memref<16x128xf32, #tpu.memory_space<vmem>>, vector<16x128xf32>,
    } else {
    }
    return
  }
  func.func @transform_0(%arg0: i32, %arg1: i32, %arg2: i32) -> (i32, i32, i32) {
    %c0_i32 = arith.constant 0 : i32
    return %arg1, %arg0, %arg2 : i32, i32, i32
  }
  func.func @transform_1(%arg0: i32, %arg1: i32, %arg2: i32) -> (i32, i32, i32) {
    %c0_i32 = arith.constant 0 : i32
    %c0_i32_0 = arith.constant 0 : i32
    return %arg1, %arg2, %c0_i32 : i32, i32, i32
  }
  func.func @transform_2(%arg0: i32, %arg1: i32, %arg2: i32) -> (i32, i32) {
    %c0_i32 = arith.constant 0 : i32
    %c0_i32_0 = arith.constant 0 : i32
    return %arg0, %c0_i32 : i32, i32
  }
  func.func @transform_3(%arg0: i32, %arg1: i32, %arg2: i32) -> (i32, i32) {
    %c0_i32 = arith.constant 0 : i32
    %c0_i32_0 = arith.constant 0 : i32
    %c0_i32_1 = arith.constant 0 : i32
    return %c0_i32, %c0_i32_0 : i32, i32
  }
  func.func @transform_4(%arg0: i32, %arg1: i32, %arg2: i32) -> (i32, i32) {
    %c0_i32 = arith.constant 0 : i32
    %c0_i32_0 = arith.constant 0 : i32
    return %arg0, %c0_i32 : i32, i32
  }
}

</mosaic_0001>

<llo_original>
// kernel: tpu_custom_call.1
$region0: #{tpu_custom_call.1}
  #allocation0 [shape = 'u32[]', space=smem, size = 0x4, offset = 0x4, fixed_abs, tag = 'smem constant byte address 0x4 - core index']
  #allocation1 [shape = 'u32[72,128]{1,0:T(1,128)}', space=vmem, size = 0x9000, scoped, tag = 'internal scratch']
  %s0 = inlined_call_operand.hbm [shape: bf16[4,16,16], index: 0, kind: input, shape index: {}]
  %s1 = inlined_call_operand.hbm [shape: bf16[4,16,128], index: 1, kind: input, shape index: {}]
  %s2 = inlined_call_operand.hbm [shape: f32[16,128], index: 2, kind: input, shape index: {}]
  %s3 = inlined_call_operand.vmem [shape: f32[1,128], index: 3, kind: input, shape index: {}]
  %s4 = inlined_call_operand.hbm [shape: f32[16,128], index: 4, kind: output, shape index: {}]
  %s5 = sld [smem:[#allocation0]]
  $region69: #{tpu_custom_call.1} parent=0
    _
  %s7 = ssub.s32 1, %s5
  %s8 = scalar_select 0, %s7, %s5
  $region1: #{tpu_custom_call.1} parent=0
    #allocation2 [shape = 'u8[8192]{0}', space=vmem, size = 0x2000, scoped, tag = 'input window, operand 0']
    #allocation3 [shape = 's32[2]{0}', space=sflag, size = 0x8, scoped, tag = 'scoped memory for tpu_custom_call.1']
    #allocation4 [shape = 's32[2]{0}', space=sflag, size = 0x8, scoped, tag = 'scoped memory for tpu_custom_call.1']
    #allocation5 [shape = 'u8[8192]{0}', space=vmem, size = 0x2000, scoped, tag = 'input window, operand 1']
    #allocation6 [shape = 's32[2]{0}', space=sflag, size = 0x8, scoped, tag = 'scoped memory for tpu_custom_call.1']
    #allocation7 [shape = 'u8[8192]{0}', space=vmem, size = 0x2000, scoped, tag = 'input window, operand 2, single buffered']
    #allocation8 [shape = 'u8[8192]{0}', space=vmem, size = 0x2000, scoped, tag = 'output window, operand 0, single buffered']
    %9 = vsyncpa [#allocation3], 0
    %s10 = scalar_lea.sflag [#allocation3], 1
    %11 = vsyncpa %s10, 0
    %12 = vsyncpa [#allocation6], 0
    %s13 = scalar_lea.sflag [#allocation6], 1
    %14 = vsyncpa %s13, 0
    %15 = vsyncpa [#allocation4], 0
    loop: start=0, step=1, limit=6
    $region2: #{tpu_custom_call.1} parent=1 // loop_pre_header
      _
    $region3: #{tpu_custom_call.1} parent=1 // loop_header
      %s17 = sphi 0, %s21
      %p18 = scmp.ge.s32.totalorder %s17, 6
      %s24 = sphi 0, %s43
      %s25 = sphi 0, %s39
      %s26 = sphi 0, %s35
      %s27 = sphi 0, %s24
      %s28 = sphi 0, %s25
      %s29 = sphi 0, %s26
      %s30 = sphi 0, %s27
      %s31 = sphi 0, %s28
      %s32 = sphi 0, %s29
      %s50 = sphi 0, %s52
      %s53 = sphi 0, %s50
      %s54 = sphi 0, %s53
      %s70 = sphi 0, %s54
      %s78 = sphi 0, %s80
      %s81 = sphi 0, %s78
      %s82 = sphi 0, %s81
      %s98 = sphi 0, %s82
      %s104 = sphi 0, %s106
      %s107 = sphi 0, %s104
      %s108 = sphi 0, %s107
      %s124 = sphi 0, %s108
      %s128 = sphi 0, %s128
      %s130 = sphi 0, %s128
      %s131 = sphi 0, %s130
      %s145 = sphi 0, %s131
      %s151 = sphi 0, %s153
      %s154 = sphi 0, %s151
      %s155 = sphi 0, %s154
      %s171 = sphi 0, %s155
    $region4: #{tpu_custom_call.1} parent=1 // loop_header_branch
      %20 = sbr.rel (%p18) target = $region8
    $region5: #{tpu_custom_call.1} parent=1 // loop_body
      %s22 = ssub.s32 %s17, 1
      %s23 = ssub.s32 %s17, 2
      %s33 = sadd.s32 1, %s26
      %p34 = scmp.ge.s32.totalorder %s33, 1
      %s35 = scalar_select %p34, 0, %s33
      %s36 = sadd.s32 1, %s25
      %s37 = scalar_select %p34, %s36, %s25
      %p38 = scmp.ge.s32.totalorder %s37, 4
      %s39 = scalar_select %p38, 0, %s37
      %s40 = sadd.s32 1, %s24
      %s41 = scalar_select %p38, %s40, %s24
      %p42 = scmp.ge.s32.totalorder %s41, 1
      %s43 = scalar_select %p42, 0, %s41
      %s44 = ssub.s32 %s25, %s39
      %s45 = ssub.s32 %s24, %s43
      %s46 = sor.u32 %s44, %s45
      %s47 = ssub.s32 %s26, %s35
      %s48 = sor.u32 %s46, %s47
      %p49 = scmp.eq.s32.totalorder %s48, 0
      %s51 = sadd.s32 %s50, 1
      %s52 = scalar_select %p49, %s50, %s51
      %p55 = pneg %p49
      %p56 = scmp.eq.s32.totalorder %s17, 3
      %p57 = por %p55, %p56
      %p58 = scmp.ne.s32.totalorder %s50, %s53
      %p59 = scmp.eq.s32.totalorder %s17, 0
      %p60 = por %p58, %p59
      %p61 = scmp.ne.s32.totalorder %s50, %s53
      %p62 = scmp.eq.s32.totalorder %s22, 3
      %p63 = por %p61, %p62
      %p64 = scmp.ne.s32.totalorder %s53, %s54
      %p65 = scmp.eq.s32.totalorder %s22, 0
      %p66 = por %p64, %p65
      %p67 = scmp.ne.s32.totalorder %s53, %s54
      %p68 = scmp.eq.s32.totalorder %s23, 3
      %p69 = por %p67, %p68
      %p71 = scmp.ne.s32.totalorder %s54, %s70
      %p72 = scmp.eq.s32.totalorder %s23, 0
      %p73 = por %p71, %p72
      %s74 = ssub.s32 %s25, %s39
      %s75 = ssub.s32 %s26, %s35
      %s76 = sor.u32 %s74, %s75
      %p77 = scmp.eq.s32.totalorder %s76, 0
      %s79 = sadd.s32 %s78, 1
      %s80 = scalar_select %p77, %s78, %s79
      %p83 = pneg %p77
      %p84 = scmp.eq.s32.totalorder %s17, 3
      %p85 = por %p83, %p84
      %p86 = scmp.ne.s32.totalorder %s78, %s81
      %p87 = scmp.eq.s32.totalorder %s17, 0
      %p88 = por %p86, %p87
      %p89 = scmp.ne.s32.totalorder %s78, %s81
      %p90 = scmp.eq.s32.totalorder %s22, 3
      %p91 = por %p89, %p90
      %p92 = scmp.ne.s32.totalorder %s81, %s82
      %p93 = scmp.eq.s32.totalorder %s22, 0
      %p94 = por %p92, %p93
      %p95 = scmp.ne.s32.totalorder %s81, %s82
      %p96 = scmp.eq.s32.totalorder %s23, 3
      %p97 = por %p95, %p96
      %p99 = scmp.ne.s32.totalorder %s82, %s98
      %p100 = scmp.eq.s32.totalorder %s23, 0
      %p101 = por %p99, %p100
      %s102 = ssub.s32 %s24, %s43
      %p103 = scmp.eq.s32.totalorder %s102, 0
      %s105 = sadd.s32 %s104, 1
      %s106 = scalar_select %p103, %s104, %s105
      %p109 = pneg %p103
      %p110 = scmp.eq.s32.totalorder %s17, 3
      %p111 = por %p109, %p110
      %p112 = scmp.ne.s32.totalorder %s104, %s107
      %p113 = scmp.eq.s32.totalorder %s17, 0
      %p114 = por %p112, %p113
      %p115 = scmp.ne.s32.totalorder %s104, %s107
      %p116 = scmp.eq.s32.totalorder %s22, 3
      %p117 = por %p115, %p116
      %p118 = scmp.ne.s32.totalorder %s107, %s108
      %p119 = scmp.eq.s32.totalorder %s22, 0
      %p120 = por %p118, %p119
      %p121 = scmp.ne.s32.totalorder %s107, %s108
      %p122 = scmp.eq.s32.totalorder %s23, 3
      %p123 = por %p121, %p122
      %p125 = scmp.ne.s32.totalorder %s108, %s124
      %p126 = scmp.eq.s32.totalorder %s23, 0
      %p127 = por %p125, %p126
      %s129 = sadd.s32 %s128, 1
      %p132 = scmp.eq.s32.totalorder %s17, 3
      %p133 = scmp.ne.s32.totalorder %s128, %s130
      %p134 = scmp.eq.s32.totalorder %s17, 0
      %p135 = por %p133, %p134
      %p136 = scmp.ne.s32.totalorder %s128, %s130
      %p137 = scmp.eq.s32.totalorder %s22, 3
      %p138 = por %p136, %p137
      %p139 = scmp.ne.s32.totalorder %s130, %s131
      %p140 = scmp.eq.s32.totalorder %s22, 0
      %p141 = por %p139, %p140
      %p142 = scmp.ne.s32.totalorder %s130, %s131
      %p143 = scmp.eq.s32.totalorder %s23, 3
      %p144 = por %p142, %p143
      %p146 = scmp.ne.s32.totalorder %s131, %s145
      %p147 = scmp.eq.s32.totalorder %s23, 0
      %p148 = por %p146, %p147
      %s149 = ssub.s32 %s24, %s43
      %p150 = scmp.eq.s32.totalorder %s149, 0
      %s152 = sadd.s32 %s151, 1
      %s153 = scalar_select %p150, %s151, %s152
      %p156 = pneg %p150
      %p157 = scmp.eq.s32.totalorder %s17, 3
      %p158 = por %p156, %p157
      %p159 = scmp.ne.s32.totalorder %s151, %s154
      %p160 = scmp.eq.s32.totalorder %s17, 0
      %p161 = por %p159, %p160
      %p162 = scmp.ne.s32.totalorder %s151, %s154
      %p163 = scmp.eq.s32.totalorder %s22, 3
      %p164 = por %p162, %p163
      %p165 = scmp.ne.s32.totalorder %s154, %s155
      %p166 = scmp.eq.s32.totalorder %s22, 0
      %p167 = por %p165, %p166
      %p168 = scmp.ne.s32.totalorder %s154, %s155
      %p169 = scmp.eq.s32.totalorder %s23, 3
      %p170 = por %p168, %p169
      %p172 = scmp.ne.s32.totalorder %s155, %s171
      %p173 = scmp.eq.s32.totalorder %s23, 0
      %p174 = por %p172, %p173
      %p175 = scmp.le.s32.totalorder 1, %s17
      %p176 = scmp.lt.s32.totalorder %s17, 5
      %p177 = pnand %p175, %p176
      %p178 = pneg %p177
      // Predicated region
      $region9: #{tpu_custom_call.1} parent=5 // pred_check
        _
      $region10: #{tpu_custom_call.1} parent=5 // pred_check_branch
        %180 = sbr.rel (%p177) target = $region12
      $region11: #{tpu_custom_call.1} parent=5 // pred_region
        %s181 = ssub.s32 %s17, 1
        // Predicated region
        $region13: #{tpu_custom_call.1} parent=11 // pred_check
          %p182 = pneg %p120
        $region14: #{tpu_custom_call.1} parent=11 // pred_check_branch
          %184 = sbr.rel (%p182) target = $region16
        $region15: #{tpu_custom_call.1} parent=11 // pred_region
          %s185 = smul.u32 2, %s27
          %187 = vsyncadd [#allocation6], 0
          %s188 = smul.addr %s185, 8
          %s189 = scalar_lea.hbm %s2, %s188
          %s190 = sshll.u32 %s189, 4
          %s191 = int_to_ptr.hbm [resolvable:$true] %s190
          %s192 = sshll.u32 [#allocation7], 4
          %s193 = int_to_ptr.vmem [resolvable:$true] %s192
          %198 = dma.hbm_to_vmem [thread:$0]  %s191, 256, %s193, [#allocation6], 128, 128, 8
        $region16: #{tpu_custom_call.1} parent=11 // pred_fallthru
          _
        // Predicated region
        $region17: #{tpu_custom_call.1} parent=11 // pred_check
          %p199 = pneg %p141
        $region18: #{tpu_custom_call.1} parent=11 // pred_check_branch
          %201 = sbr.rel (%p199) target = $region20
        $region19: #{tpu_custom_call.1} parent=11 // pred_region
          _
        $region20: #{tpu_custom_call.1} parent=11 // pred_fallthru
          _
      $region12: #{tpu_custom_call.1} parent=5 // pred_fallthru
        _
      %p202 = scmp.lt.s32.totalorder %s17, 4
      // Predicated region
      $region21: #{tpu_custom_call.1} parent=5 // pred_check
        %p203 = pneg %p202
      $region22: #{tpu_custom_call.1} parent=5 // pred_check_branch
        %205 = sbr.rel (%p203) target = $region24
      $region23: #{tpu_custom_call.1} parent=5 // pred_region
        // Predicated region
        $region25: #{tpu_custom_call.1} parent=23 // pred_check
          %p206 = pneg %p60
        $region26: #{tpu_custom_call.1} parent=23 // pred_check_branch
          %208 = sbr.rel (%p206) target = $region28
        $region27: #{tpu_custom_call.1} parent=23 // pred_region
          %s209 = sand.u32 %s50, 1
          %s210 = scalar_lea.sflag [#allocation3], %s209
          %s211 = sand.u32 %s50, 1
          %s212 = smul.addr %s211, 8
          %s213 = scalar_lea.vmem [#allocation2], %s212
          %s214 = smul.u32 2, %s24
          %216 = vsyncadd %s210, 0
          %s217 = sadd.s32 %s26, %s214
          %s218 = smul.addr %s25, 2
          %s219 = sadd.s32 %s217, %s218
          %s220 = smul.addr %s219, 4
          %s221 = scalar_lea.hbm %s0, %s220
          %s222 = sshll.u32 %s221, 4
          %s223 = int_to_ptr.hbm [resolvable:$true] %s222
          %s224 = sshll.u32 %s213, 4
          %s225 = int_to_ptr.vmem [resolvable:$true] %s224
          %230 = dma.hbm_to_vmem [thread:$0]  %s223, 128, %s225, %s210, 64, 64, 4
        $region28: #{tpu_custom_call.1} parent=23 // pred_fallthru
          _
        // Predicated region
        $region29: #{tpu_custom_call.1} parent=23 // pred_check
          %p231 = pneg %p88
        $region30: #{tpu_custom_call.1} parent=23 // pred_check_branch
          %233 = sbr.rel (%p231) target = $region32
        $region31: #{tpu_custom_call.1} parent=23 // pred_region
          %s234 = sand.u32 %s17, 1
          %s235 = scalar_lea.sflag [#allocation6], %s234
          %s236 = sand.u32 %s78, 1
          %s237 = smul.addr %s236, 8
          %s238 = scalar_lea.vmem [#allocation5], %s237
          %s239 = smul.u32 2, %s26
          %241 = vsyncadd %s235, 0
          %s242 = smul.addr %s25, 2
          %s243 = sadd.s32 %s239, %s242
          %s244 = smul.addr %s243, 4
          %s245 = scalar_lea.hbm %s1, %s244
          %s246 = sshll.u32 %s245, 4
          %s247 = int_to_ptr.hbm [resolvable:$true] %s246
          %s248 = sshll.u32 %s238, 4
          %s249 = int_to_ptr.vmem [resolvable:$true] %s248
          %254 = dma.hbm_to_vmem [thread:$0]  %s247, 128, %s249, %s235, 64, 64, 4
        $region32: #{tpu_custom_call.1} parent=23 // pred_fallthru
          _
      $region24: #{tpu_custom_call.1} parent=5 // pred_fallthru
        _
      %p255 = scmp.le.s32.totalorder 1, %s17
      %p256 = scmp.lt.s32.totalorder %s17, 5
      %p257 = pnand %p255, %p256
      %p258 = pneg %p257
      // Predicated region
      $region33: #{tpu_custom_call.1} parent=5 // pred_check
        _
      $region34: #{tpu_custom_call.1} parent=5 // pred_check_branch
        %260 = sbr.rel (%p257) target = $region36
      $region35: #{tpu_custom_call.1} parent=5 // pred_region
        %s261 = ssub.s32 %s17, 1
        %s262 = sand.u32 %s53, 1
        %s263 = scalar_lea.sflag [#allocation3], %s262
        %s264 = sand.u32 %s53, 1
        %s265 = smul.addr %s264, 8
        %s266 = scalar_lea.vmem [#allocation2], %s265
        // Predicated region
        $region37: #{tpu_custom_call.1} parent=35 // pred_check
          %p267 = pneg %p66
        $region38: #{tpu_custom_call.1} parent=35 // pred_check_branch
          %269 = sbr.rel (%p267) target = $region40
        $region39: #{tpu_custom_call.1} parent=35 // pred_region
          %271 = dma.done %s263, 128
        $region40: #{tpu_custom_call.1} parent=35 // pred_fallthru
          _
        %s272 = sand.u32 %s22, 1
        %s273 = scalar_lea.sflag [#allocation6], %s272
        %s274 = sand.u32 %s81, 1
        %s275 = smul.addr %s274, 8
        %s276 = scalar_lea.vmem [#allocation5], %s275
        // Predicated region
        $region41: #{tpu_custom_call.1} parent=35 // pred_check
          %p277 = pneg %p94
        $region42: #{tpu_custom_call.1} parent=35 // pred_check_branch
          %279 = sbr.rel (%p277) target = $region44
        $region43: #{tpu_custom_call.1} parent=35 // pred_region
          %281 = dma.done %s273, 128
        $region44: #{tpu_custom_call.1} parent=35 // pred_fallthru
          _
        // Predicated region
        $region45: #{tpu_custom_call.1} parent=35 // pred_check
          %p282 = pneg %p120
        $region46: #{tpu_custom_call.1} parent=35 // pred_check_branch
          %284 = sbr.rel (%p282) target = $region48
        $region47: #{tpu_custom_call.1} parent=35 // pred_region
          %286 = dma.done [#allocation6], 256
        $region48: #{tpu_custom_call.1} parent=35 // pred_fallthru
          _
        %s287 = sand.u32 %s53, 1
        %s288 = scalar_lea.sflag [#allocation3], %s287
        %s289 = sand.u32 %s53, 1
        %s290 = smul.addr %s289, 8
        %s291 = scalar_lea.vmem [#allocation2], %s290
        %p292 = pneg %p66
        %p293 = pneg %p63
        %s294 = sand.u32 %s22, 1
        %s295 = scalar_lea.sflag [#allocation6], %s294
        %s296 = sand.u32 %s81, 1
        %s297 = smul.addr %s296, 8
        %s298 = scalar_lea.vmem [#allocation5], %s297
        %p299 = pneg %p94
        %p300 = pneg %p91
        %p301 = pneg %p120
        %p302 = pneg %p117
        %p303 = pneg %p141
        %p304 = pneg %p138
        %p305 = pneg %p167
        %p306 = pneg %p164
        %s307 = smul.u32 2, %s27
        %s308 = smul.u32 2, %s29
        %s309 = smul.u32 2, %s27
        %s310 = smul.u32 2, %s27
        %p312 = scmp.eq.s32.totalorder %s28, 0
        %p313 = scmp.eq.s32.totalorder %s29, 0
        %p314 = pnand %p312, %p313
        %p315 = pneg %p314
        // Predicated region
        $region49: #{tpu_custom_call.1} parent=35 // pred_check
          _
        $region50: #{tpu_custom_call.1} parent=35 // pred_check_branch
          %317 = sbr.rel (%p314) target = $region52
        $region51: #{tpu_custom_call.1} parent=35 // pred_region
          %v318 = vld [vmem:[#allocation7] sm:$0xff]
          %v319 = vld [vmem:[#allocation7 + $0x8] sm:$0xff]
          %v320 = vld [vmem:[%s3] sm:$0x1]
          %v322 = vperm.slane %v320, 0
          %v324 = vadd.f32 %v318, %v322
          %v325 = vadd.f32 %v319, %v322
          %326 = vst [vmem:[#allocation8] sm:$0xff] %v324
          %327 = vst [vmem:[#allocation8 + $0x8] sm:$0xff] %v325
        $region52: #{tpu_custom_call.1} parent=35 // pred_fallthru
          _
        %v328 = vld [vmem:[#allocation8] sm:$0xff]
        %v329 = vld [vmem:[#allocation8 + $0x8] sm:$0xff]
        %v330 = vld [vmem:[%s266] sm:$0xf]
        %v331 = vld [vmem:[%s266 + $0x4] sm:$0xf]
        %v332 = vld [vmem:[%s276] sm:$0xf]
        %v333 = vld [vmem:[%s276 + $0x4] sm:$0xf]
        %v336 = vunpack.c.l.b16 %v330
        %v337 = vunpack.c.l.b16 %v331
        %v338 = vpack.c.b16 %v337, %v336
        %v341 = vunpack.c.l.b16 %v332
        %v342 = vunpack.c.l.b16 %v333
        %v343 = vpack.c.b16 %v342, %v341
        %vm345 = vcmask 130048
        %v347 = vsel %vm345, %v338, 0
        %349 = vmatpush.bf16.msra.mxu0 0
        %350 = vmatpush.bf16.msra.mxu0 0
        %351 = vmatpush.bf16.msra.mxu0 0
        %352 = vmatpush.bf16.msra.mxu0 0
        %353 = vmatpush.bf16.msra.mxu0 0
        %354 = vmatpush.bf16.msra.mxu0 0
        %355 = vmatpush.bf16.msra.mxu0 0
        %356 = vmatpush.bf16.msra.mxu0 %v343
        %357 = vmatmul.bf16.gmra.mxu0 %v347
        %v358 = vpop.f32.mrf.mxu0
        %v359 = vadd.f32 0.0, %v358
        %v360 = vpop.f32.mrf.mxu0
        %v361 = vadd.f32 0.0, %v360
        %362 = vdwg.mxu0
        %v363 = vadd.f32 %v328, %v359
        %v364 = vadd.f32 %v329, %v361
        %365 = vst [vmem:[#allocation8] sm:$0xff] %v363
        %366 = vst [vmem:[#allocation8 + $0x8] sm:$0xff] %v364
        %p367 = scmp.eq.s32.totalorder %s28, 3
        %p368 = pnand %p367, %p313
        %p369 = pneg %p368
        // Predicated region
        $region53: #{tpu_custom_call.1} parent=35 // pred_check
          _
        $region54: #{tpu_custom_call.1} parent=35 // pred_check_branch
          %371 = sbr.rel (%p368) target = $region56
        $region55: #{tpu_custom_call.1} parent=35 // pred_region
          %v372 = vld [vmem:[#allocation8] sm:$0xff]
          %v373 = vld [vmem:[#allocation8 + $0x8] sm:$0xff]
          %vm374 = vcmp.ge.f32.partialorder %v372, 0.0
          %vm375 = vcmp.ge.f32.partialorder %v373, 0.0
          %v376 = vmul.f32 %v372, 0.01
          %v377 = vmul.f32 %v373, 0.01
          %v378 = vsel %vm374, %v372, %v376
          %v379 = vsel %vm375, %v373, %v377
          %380 = vst [vmem:[#allocation8] sm:$0xff] %v378
          %381 = vst [vmem:[#allocation8 + $0x8] sm:$0xff] %v379
        $region56: #{tpu_custom_call.1} parent=35 // pred_fallthru
          _
        // Predicated region
        $region57: #{tpu_custom_call.1} parent=35 // pred_check
          %p382 = pneg %p164
        $region58: #{tpu_custom_call.1} parent=35 // pred_check_branch
          %384 = sbr.rel (%p382) target = $region60
        $region59: #{tpu_custom_call.1} parent=35 // pred_region
          %s385 = smul.u32 2, %s27
          %387 = vsyncadd [#allocation4], 0
          %s388 = smul.addr %s385, 8
          %s389 = scalar_lea.hbm %s4, %s388
          %s390 = sshll.u32 [#allocation8], 4
          %s391 = int_to_ptr.vmem [resolvable:$true] %s390
          %s392 = sshll.u32 %s389, 4
          %s393 = int_to_ptr.hbm [resolvable:$true] %s392
          %398 = dma.vmem_to_hbm [thread:$0]  %s391, 256, %s393, [#allocation4], 128, 128, 8
        $region60: #{tpu_custom_call.1} parent=35 // pred_fallthru
          _
        // Predicated region
        $region61: #{tpu_custom_call.1} parent=35 // pred_check
          %p399 = pneg %p164
        $region62: #{tpu_custom_call.1} parent=35 // pred_check_branch
          %401 = sbr.rel (%p399) target = $region64
        $region63: #{tpu_custom_call.1} parent=35 // pred_region
          %403 = dma.done [#allocation4], 256
        $region64: #{tpu_custom_call.1} parent=35 // pred_fallthru
          _
      $region36: #{tpu_custom_call.1} parent=5 // pred_fallthru
        _
      %p404 = scmp.le.s32.totalorder 2, %s17
      // Predicated region
      $region65: #{tpu_custom_call.1} parent=5 // pred_check
        %p405 = pneg %p404
      $region66: #{tpu_custom_call.1} parent=5 // pred_check_branch
        %407 = sbr.rel (%p405) target = $region68
      $region67: #{tpu_custom_call.1} parent=5 // pred_region
        %s408 = ssub.s32 %s17, 2
      $region68: #{tpu_custom_call.1} parent=5 // pred_fallthru
        _
    $region6: #{tpu_custom_call.1} parent=1 // loop_footer
      %s21 = sadd.s32 1, %s17
    $region7: #{tpu_custom_call.1} parent=1 // loop_footer_branch
      %16 = sbr.rel target = $region3
    $region8: #{tpu_custom_call.1} parent=1 // loop_exit
      _
    %409 = vsyncpa [#allocation3], 1
    %s410 = scalar_lea.sflag [#allocation3], 1
    %411 = vsyncpa %s410, 1
    %412 = vsyncpa [#allocation6], 1
    %s413 = scalar_lea.sflag [#allocation6], 1
    %414 = vsyncpa %s413, 1
    %415 = vsyncpa [#allocation4], 1
    %s416 = scalar_lea.sflag [#allocation4], 1
    %417 = vsyncpa %s416, 1

</llo_original>
